<compile_context>
chip_gen: v7x
topology: tpu7x:2x2x1
jax: 0.10.0
libtpu: 0.0.40
codegen_flags: <defaults>
</compile_context>

<pallas_src>
import functools
import math

import jax
import jax.numpy as jnp
import numpy as np
from jax import lax
from jax.experimental import pallas as pl
from jax.experimental.pallas import tpu as pltpu


_TARGET_BLOCK_BYTES = 2 * 1024 * 1024  # ~2 MiB output tile (near HBM-roofline sweet spot)


def _pe_kernel(tcol_ref, trep_ref, jrep_ref, va_ref, out_ref, *, inv_delta_r: float):
    """One grid step: lane-dense (TQ, TK*d) tile of pe for (batch b, row-tile qi, col-tile kj)."""
    qi = pl.program_id(1)
    TQ = tcol_ref.shape[1]

    ti = tcol_ref[0]                       # (TQ, 1)     t[b, i] per row
    tj = trep_ref[0]                       # (1, TK*d)   t[b, j] repeated d times along lanes
    jv = jrep_ref[...]                     # (1, TK*d)   global j index, repeated d times
    iv = lax.broadcasted_iota(jnp.int32, (TQ, 1), 0) + qi * TQ   # (TQ, 1) global i index

    delta = tj - ti                        # (TQ, TK*d)
    absd = jnp.abs(delta)                  # cdist p=1 (single feature)
    dt = jnp.where(jv > iv, absd, -absd)   # dir * dist (diagonal is exactly 0 either way)
    # Hardtanh(dt / delta_r); pe = (1 - lm)*va + lm*(-va) == -dt' * va
    coef = -jnp.clip(dt * inv_delta_r, -1.0, 1.0)
    out_ref[0] = (coef * va_ref[...]).astype(out_ref.dtype)


def _pick_tiles(S: int, d_model: int) -> tuple[int, int]:
    """Pick (TQ, TK): TQ sublane-aligned divisor of S, TK such that TK*d is lane-dense."""
    elt = 4
    # Row tile: multiple of 8 dividing S, capped for finer grid parallelism; fallback = full S.
    tq = S
    for c in range(8, min(S, 256) + 1, 8):
        if S % c == 0:
            tq = c
    # Column tile: TK*d_model must be a multiple of 128 (unmasked vst) and divide S*d.
    lane_align = 128 // math.gcd(d_model, 128)
    max_tk = max(lane_align, _TARGET_BLOCK_BYTES // (tq * d_model * elt))
    tk = S  # fallback: full trailing dim (always a legal block)
    c = lane_align
    while c <= min(S, max_tk):
        if S % c == 0:
            tk = c
        c += lane_align
    return tq, tk


def relative_pos_enc_interp(t: jax.Array, va: jax.Array, delta_r: float) -> jax.Array:
    """t: (B, S) float32 time grid, va: (1, d_model) float32 -> pe: (B, S, S, d_model) f32."""
    B, S = t.shape
    d_model = va.shape[-1]
    TQ, TK = _pick_tiles(S, d_model)
    n_q, n_k = S // TQ, S // TK
    L = S * d_model

    # Wrapper-side layout plumbing (all tiny arrays; no big transposes).
    t_col = t.astype(jnp.float32)[:, :, None]                               # (B, S, 1)
    t_rep = jnp.repeat(t.astype(jnp.float32), d_model, axis=-1)[:, None, :]  # (B, 1, S*d)
    j_rep = jnp.repeat(jnp.arange(S, dtype=jnp.int32), d_model)[None, :]     # (1, S*d)
    va_tiled = jnp.tile(va.astype(jnp.float32), (1, TK))                     # (1, TK*d)

    kernel = functools.partial(_pe_kernel, inv_delta_r=float(1.0 / delta_r))

    out_bytes = B * S * L * 4
    in_bytes = (t_col.size + t_rep.size + j_rep.size + va_tiled.size) * 4
    cost = pl.CostEstimate(flops=6 * B * S * L, transcendentals=0,
                           bytes_accessed=out_bytes + in_bytes)

    pe_flat = pl.pallas_call(
        kernel,
        out_shape=jax.ShapeDtypeStruct((B, S, L), jnp.float32),
        grid=(B, n_q, n_k),
        in_specs=[
            pl.BlockSpec((1, TQ, 1), lambda b, qi, kj: (b, qi, 0)),            # t_i column
            pl.BlockSpec((1, 1, TK * d_model), lambda b, qi, kj: (b, 0, kj)),  # t_j, lane-dense
            pl.BlockSpec((1, TK * d_model), lambda b, qi, kj: (0, kj)),        # j index, lane-dense
            pl.BlockSpec((1, TK * d_model), lambda b, qi, kj: (0, 0)),         # va tiled (invariant)
        ],
        out_specs=pl.BlockSpec((1, TQ, TK * d_model), lambda b, qi, kj: (b, qi, kj)),
        compiler_params=pltpu.CompilerParams(
            dimension_semantics=("parallel", "parallel", "parallel")),
        cost_estimate=cost,
    )(t_col, t_rep, j_rep, va_tiled)

    # Trailing-dim reshape back to (B, S, S, d_model): free metadata change.
    return pe_flat.reshape(B, S, S, d_model)


def _reference(t_bs1: np.ndarray, va: np.ndarray, delta_r: float) -> np.ndarray:
    """Pure-numpy mirror of the PyTorch module for a correctness check."""
    t = t_bs1[..., 0]                                    # (B, S)
    B, S = t.shape
    dist = np.abs(t[:, :, None] - t[:, None, :])         # (B, S, S)
    i_idx = np.arange(S)[:, None]
    j_idx = np.arange(S)[None, :]
    dir_mat = np.where(j_idx > i_idx, 1.0, np.where(j_idx < i_idx, -1.0, 0.0))
    dt = dir_mat[None] * dist
    dt_prime = np.clip(dt / delta_r, -1.0, 1.0)
    lm = (dt_prime + 1.0) / 2.0
    lm = lm[..., None]                                    # (B, S, S, 1)
    vb = -va
    return (1.0 - lm) * va[None, None] + lm * vb[None, None]


if __name__ == "__main__":
    B, S, d_model = 2, 8, 32
    delta_r = 0.5

    key = jax.random.PRNGKey(0)
    k_t, k_v = jax.random.split(key)

    # Time grid, shape (B, S, 1) as the torch module would receive.
    t = jnp.sort(jax.random.uniform(k_t, (B, S, 1), dtype=jnp.float32), axis=1)

    # Deterministic "random vectors" mirroring _set_random_vectors.
    va_ = (jax.random.uniform(k_v, (1, d_model), dtype=jnp.float32) - 0.5) * 2.0
    va = va_ / jnp.linalg.norm(va_, ord=np.inf)

    pe = relative_pos_enc_interp(t[..., 0], va, delta_r)
    pe = jax.block_until_ready(pe)

    ref = _reference(np.asarray(t), np.asarray(va), delta_r)
    assert pe.shape == (B, S, S, d_model)
    np.testing.assert_allclose(np.asarray(pe), ref, rtol=1e-6, atol=1e-6)

    print("KERNEL_OK")
</pallas_src>

<mosaic_0001>
module attributes {stable_mosaic.version = 11 : i64} {
  func.func @_pe_kernel(%arg0: i32, %arg1: i32, %arg2: i32, %arg3: memref<1x8x1xf32, #tpu.memory_space<vmem>>, %arg4: memref<1x1x256xf32, #tpu.memory_space<vmem>>, %arg5: memref<1x256xi32, #tpu.memory_space<vmem>>, %arg6: memref<1x256xf32, #tpu.memory_space<vmem>>, %arg7: memref<1x8x256xf32, #tpu.memory_space<vmem>>) attributes {dimension_semantics = [#tpu.dimension_semantics<parallel>, #tpu.dimension_semantics<parallel>, #tpu.dimension_semantics<parallel>], iteration_bounds = array<i64: 2, 1, 1>, scalar_prefetch = 0 : i64, scratch_operands = 0 : i64, tpu.core_type = #tpu.core_type<tc>, window_params = [{transform_indices = @transform_0, window_bounds = array<i64: 1, 8, 1>}, {transform_indices = @transform_1, window_bounds = array<i64: 1, 1, 256>}, {transform_indices = @transform_2, window_bounds = array<i64: 1, 256>}, {pipeline_mode = #tpu.pipeline_mode<synchronous>, transform_indices = @transform_3, window_bounds = array<i64: 1, 256>}, {transform_indices = @transform_4, window_bounds = array<i64: 1, 8, 256>}]} {
    %c0 = arith.constant 0 : index
    %c0_0 = arith.constant 0 : index
    %c0_1 = arith.constant 0 : index
    %0 = vector.load %arg3[%c0, %c0_0, %c0_1] : memref<1x8x1xf32, #tpu.memory_space<vmem>>, vector<1x8x1xf32>
    %1 = vector.shape_cast %0 : vector<1x8x1xf32> to vector<8x1xf32>
    %c0_2 = arith.constant 0 : index
    %c0_3 = arith.constant 0 : index
    %c0_4 = arith.constant 0 : index
    %2 = vector.load %arg4[%c0_2, %c0_3, %c0_4] : memref<1x1x256xf32, #tpu.memory_space<vmem>>, vector<1x1x256xf32>
    %3 = vector.shape_cast %2 : vector<1x1x256xf32> to vector<1x256xf32>
    %c0_5 = arith.constant 0 : index
    %c0_6 = arith.constant 0 : index
    %4 = vector.load %arg5[%c0_5, %c0_6] : memref<1x256xi32, #tpu.memory_space<vmem>>, vector<1x256xi32>
    %5 = tpu.iota {dimensions = array<i32: 0>} : vector<8x1xi32>
    %c8_i32 = arith.constant 8 : i32
    %6 = arith.muli %arg1, %c8_i32 : i32
    %7 = vector.broadcast %6 : i32 to vector<8x1xi32>
    %8 = arith.addi %5, %7 : vector<8x1xi32>
    %9 = vector.broadcast %3 : vector<1x256xf32> to vector<8x256xf32>
    %10 = vector.broadcast %1 : vector<8x1xf32> to vector<8x256xf32>
    %11 = arith.subf %9, %10 : vector<8x256xf32>
    %12 = math.absf %11 : vector<8x256xf32>
    %13 = vector.broadcast %4 : vector<1x256xi32> to vector<8x256xi32>
    %14 = vector.broadcast %8 : vector<8x1xi32> to vector<8x256xi32>
    %15 = arith.cmpi sgt, %13, %14 : vector<8x256xi32>
    %cst = arith.constant 0.000000e+00 : f32
    %16 = vector.broadcast %cst : f32 to vector<8x256xf32>
    %17 = arith.subf %16, %12 : vector<8x256xf32>
    %18 = arith.select %15, %12, %17 : vector<8x256xi1>, vector<8x256xf32>
    %cst_7 = arith.constant 2.000000e+00 : f32
    %19 = vector.broadcast %cst_7 : f32 to vector<8x256xf32>
    %20 = arith.mulf %18, %19 : vector<8x256xf32>
    %cst_8 = arith.constant -1.000000e+00 : f32
    %cst_9 = arith.constant 1.000000e+00 : f32
    %21 = vector.broadcast %cst_8 : f32 to vector<8x256xf32>
    %22 = arith.maximumf %21, %20 : vector<8x256xf32>
    %23 = vector.broadcast %cst_9 : f32 to vector<8x256xf32>
    %24 = arith.minimumf %23, %22 : vector<8x256xf32>
    %cst_10 = arith.constant 0.000000e+00 : f32
    %25 = vector.broadcast %cst_10 : f32 to vector<8x256xf32>
    %26 = arith.subf %25, %24 : vector<8x256xf32>
    %c0_11 = arith.constant 0 : index
    %c0_12 = arith.constant 0 : index
    %27 = vector.load %arg6[%c0_11, %c0_12] : memref<1x256xf32, #tpu.memory_space<vmem>>, vector<1x256xf32>
    %28 = vector.broadcast %27 : vector<1x256xf32> to vector<8x256xf32>
    %29 = arith.mulf %26, %28 : vector<8x256xf32>
    %c0_13 = arith.constant 0 : index
    %c0_14 = arith.constant 0 : index
    %c0_15 = arith.constant 0 : index
    %30 = vector.load %arg7[%c0_13, %c0_14, %c0_15] : memref<1x8x256xf32, #tpu.memory_space<vmem>>, vector<1x8x256xf32>
    %31 = vector.shape_cast %30 : vector<1x8x256xf32> to vector<8x256xf32>
    %32 = vector.shape_cast %29 : vector<8x256xf32> to vector<1x8x256xf32>
    tpu.vector_store %arg7[%c0_13, %c0_14, %c0_15], %32 {strides = array<i32>} : memref<1x8x256xf32, #tpu.memory_space<vmem>>, vector<1x8x256xf32>,
    return
  }
  func.func @transform_0(%arg0: i32, %arg1: i32, %arg2: i32) -> (i32, i32, i32) {
    %c0_i32 = arith.constant 0 : i32
    %c0_i32_0 = arith.constant 0 : i32
    return %arg0, %arg1, %c0_i32 : i32, i32, i32
  }
  func.func @transform_1(%arg0: i32, %arg1: i32, %arg2: i32) -> (i32, i32, i32) {
    %c0_i32 = arith.constant 0 : i32
    %c0_i32_0 = arith.constant 0 : i32
    return %arg0, %c0_i32, %arg2 : i32, i32, i32
  }
  func.func @transform_2(%arg0: i32, %arg1: i32, %arg2: i32) -> (i32, i32) {
    %c0_i32 = arith.constant 0 : i32
    %c0_i32_0 = arith.constant 0 : i32
    return %c0_i32, %arg2 : i32, i32
  }
  func.func @transform_3(%arg0: i32, %arg1: i32, %arg2: i32) -> (i32, i32) {
    %c0_i32 = arith.constant 0 : i32
    %c0_i32_0 = arith.constant 0 : i32
    %c0_i32_1 = arith.constant 0 : i32
    return %c0_i32, %c0_i32_0 : i32, i32
  }
  func.func @transform_4(%arg0: i32, %arg1: i32, %arg2: i32) -> (i32, i32, i32) {
    %c0_i32 = arith.constant 0 : i32
    return %arg0, %arg1, %arg2 : i32, i32, i32
  }
}

</mosaic_0001>

<llo_original>
// kernel: tpu_custom_call.1
$region0: #{tpu_custom_call.1}
  #allocation0 [shape = 'u32[]', space=smem, size = 0x4, offset = 0x4, fixed_abs, tag = 'smem constant byte address 0x4 - core index']
  #allocation1 [shape = 'u32[144,128]{1,0:T(1,128)}', space=vmem, size = 0x12000, scoped, tag = 'internal scratch']
  %s0 = inlined_call_operand.vmem [shape: f32[2,8,1], index: 0, kind: input, shape index: {}]
  %s1 = inlined_call_operand.vmem [shape: f32[2,1,256], index: 1, kind: input, shape index: {}]
  %s2 = inlined_call_operand.vmem [shape: s32[1,256], index: 2, kind: input, shape index: {}]
  %s3 = inlined_call_operand.vmem [shape: f32[1,256], index: 3, kind: input, shape index: {}]
  %s4 = inlined_call_operand.hbm [shape: f32[2,8,256], index: 4, kind: output, shape index: {}]
  %s5 = sld [smem:[#allocation0]]
  $region49: #{tpu_custom_call.1} parent=0
    _
  %s7 = ssub.s32 1, %s5
  %s8 = scalar_select 0, %s7, %s5
  $region1: #{tpu_custom_call.1} parent=0
    #allocation2 [shape = 'u8[16384]{0}', space=vmem, size = 0x4000, scoped, tag = 'output window, operand 0']
    #allocation3 [shape = 's32[2]{0}', space=sflag, size = 0x8, scoped, tag = 'scoped memory for tpu_custom_call.1']
    %9 = vsyncpa [#allocation3], 0
    %s10 = scalar_lea.sflag [#allocation3], 1
    %11 = vsyncpa %s10, 0
    loop: start=0, step=1, limit=4
    $region2: #{tpu_custom_call.1} parent=1 // loop_pre_header
      _
    $region3: #{tpu_custom_call.1} parent=1 // loop_header
      %s13 = sphi 0, %s17
      %p14 = scmp.ge.s32.totalorder %s13, 4
      %s20 = sphi 0, %s39
      %s21 = sphi 0, %s35
      %s22 = sphi 0, %s31
      %s23 = sphi 0, %s20
      %s24 = sphi 0, %s21
      %s25 = sphi 0, %s22
      %s26 = sphi 0, %s23
      %s27 = sphi 0, %s24
      %s28 = sphi 0, %s25
      %s44 = sphi 0, %s46
      %s47 = sphi 0, %s44
      %s48 = sphi 0, %s47
      %s64 = sphi 0, %s48
      %s72 = sphi 0, %s74
      %s75 = sphi 0, %s72
      %s76 = sphi 0, %s75
      %s92 = sphi 0, %s76
      %s98 = sphi 0, %s100
      %s101 = sphi 0, %s98
      %s102 = sphi 0, %s101
      %s118 = sphi 0, %s102
      %s122 = sphi 0, %s122
      %s124 = sphi 0, %s122
      %s125 = sphi 0, %s124
      %s139 = sphi 0, %s125
      %s149 = sphi 0, %s151
      %s152 = sphi 0, %s149
      %s153 = sphi 0, %s152
      %s169 = sphi 0, %s153
    $region4: #{tpu_custom_call.1} parent=1 // loop_header_branch
      %16 = sbr.rel (%p14) target = $region8
    $region5: #{tpu_custom_call.1} parent=1 // loop_body
      %s18 = ssub.s32 %s13, 1
      %s19 = ssub.s32 %s13, 2
      %s29 = sadd.s32 1, %s22
      %p30 = scmp.ge.s32.totalorder %s29, 1
      %s31 = scalar_select %p30, 0, %s29
      %s32 = sadd.s32 1, %s21
      %s33 = scalar_select %p30, %s32, %s21
      %p34 = scmp.ge.s32.totalorder %s33, 1
      %s35 = scalar_select %p34, 0, %s33
      %s36 = sadd.s32 1, %s20
      %s37 = scalar_select %p34, %s36, %s20
      %p38 = scmp.ge.s32.totalorder %s37, 2
      %s39 = scalar_select %p38, 0, %s37
      %s40 = ssub.s32 %s20, %s39
      %s41 = ssub.s32 %s21, %s35
      %s42 = sor.u32 %s40, %s41
      %p43 = scmp.eq.s32.totalorder %s42, 0
      %s45 = sadd.s32 %s44, 1
      %s46 = scalar_select %p43, %s44, %s45
      %p49 = pneg %p43
      %p50 = scmp.eq.s32.totalorder %s13, 1
      %p51 = por %p49, %p50
      %p52 = scmp.ne.s32.totalorder %s44, %s47
      %p53 = scmp.eq.s32.totalorder %s13, 0
      %p54 = por %p52, %p53
      %p55 = scmp.ne.s32.totalorder %s44, %s47
      %p56 = scmp.eq.s32.totalorder %s18, 1
      %p57 = por %p55, %p56
      %p58 = scmp.ne.s32.totalorder %s47, %s48
      %p59 = scmp.eq.s32.totalorder %s18, 0
      %p60 = por %p58, %p59
      %p61 = scmp.ne.s32.totalorder %s47, %s48
      %p62 = scmp.eq.s32.totalorder %s19, 1
      %p63 = por %p61, %p62
      %p65 = scmp.ne.s32.totalorder %s48, %s64
      %p66 = scmp.eq.s32.totalorder %s19, 0
      %p67 = por %p65, %p66
      %s68 = ssub.s32 %s20, %s39
      %s69 = ssub.s32 %s22, %s31
      %s70 = sor.u32 %s68, %s69
      %p71 = scmp.eq.s32.totalorder %s70, 0
      %s73 = sadd.s32 %s72, 1
      %s74 = scalar_select %p71, %s72, %s73
      %p77 = pneg %p71
      %p78 = scmp.eq.s32.totalorder %s13, 1
      %p79 = por %p77, %p78
      %p80 = scmp.ne.s32.totalorder %s72, %s75
      %p81 = scmp.eq.s32.totalorder %s13, 0
      %p82 = por %p80, %p81
      %p83 = scmp.ne.s32.totalorder %s72, %s75
      %p84 = scmp.eq.s32.totalorder %s18, 1
      %p85 = por %p83, %p84
      %p86 = scmp.ne.s32.totalorder %s75, %s76
      %p87 = scmp.eq.s32.totalorder %s18, 0
      %p88 = por %p86, %p87
      %p89 = scmp.ne.s32.totalorder %s75, %s76
      %p90 = scmp.eq.s32.totalorder %s19, 1
      %p91 = por %p89, %p90
      %p93 = scmp.ne.s32.totalorder %s76, %s92
      %p94 = scmp.eq.s32.totalorder %s19, 0
      %p95 = por %p93, %p94
      %s96 = ssub.s32 %s22, %s31
      %p97 = scmp.eq.s32.totalorder %s96, 0
      %s99 = sadd.s32 %s98, 1
      %s100 = scalar_select %p97, %s98, %s99
      %p103 = pneg %p97
      %p104 = scmp.eq.s32.totalorder %s13, 1
      %p105 = por %p103, %p104
      %p106 = scmp.ne.s32.totalorder %s98, %s101
      %p107 = scmp.eq.s32.totalorder %s13, 0
      %p108 = por %p106, %p107
      %p109 = scmp.ne.s32.totalorder %s98, %s101
      %p110 = scmp.eq.s32.totalorder %s18, 1
      %p111 = por %p109, %p110
      %p112 = scmp.ne.s32.totalorder %s101, %s102
      %p113 = scmp.eq.s32.totalorder %s18, 0
      %p114 = por %p112, %p113
      %p115 = scmp.ne.s32.totalorder %s101, %s102
      %p116 = scmp.eq.s32.totalorder %s19, 1
      %p117 = por %p115, %p116
      %p119 = scmp.ne.s32.totalorder %s102, %s118
      %p120 = scmp.eq.s32.totalorder %s19, 0
      %p121 = por %p119, %p120
      %s123 = sadd.s32 %s122, 1
      %p126 = scmp.eq.s32.totalorder %s13, 1
      %p127 = scmp.ne.s32.totalorder %s122, %s124
      %p128 = scmp.eq.s32.totalorder %s13, 0
      %p129 = por %p127, %p128
      %p130 = scmp.ne.s32.totalorder %s122, %s124
      %p131 = scmp.eq.s32.totalorder %s18, 1
      %p132 = por %p130, %p131
      %p133 = scmp.ne.s32.totalorder %s124, %s125
      %p134 = scmp.eq.s32.totalorder %s18, 0
      %p135 = por %p133, %p134
      %p136 = scmp.ne.s32.totalorder %s124, %s125
      %p137 = scmp.eq.s32.totalorder %s19, 1
      %p138 = por %p136, %p137
      %p140 = scmp.ne.s32.totalorder %s125, %s139
      %p141 = scmp.eq.s32.totalorder %s19, 0
      %p142 = por %p140, %p141
      %s143 = ssub.s32 %s20, %s39
      %s144 = ssub.s32 %s21, %s35
      %s145 = sor.u32 %s143, %s144
      %s146 = ssub.s32 %s22, %s31
      %s147 = sor.u32 %s145, %s146
      %p148 = scmp.eq.s32.totalorder %s147, 0
      %s150 = sadd.s32 %s149, 1
      %s151 = scalar_select %p148, %s149, %s150
      %p154 = pneg %p148
      %p155 = scmp.eq.s32.totalorder %s13, 1
      %p156 = por %p154, %p155
      %p157 = scmp.ne.s32.totalorder %s149, %s152
      %p158 = scmp.eq.s32.totalorder %s13, 0
      %p159 = por %p157, %p158
      %p160 = scmp.ne.s32.totalorder %s149, %s152
      %p161 = scmp.eq.s32.totalorder %s18, 1
      %p162 = por %p160, %p161
      %p163 = scmp.ne.s32.totalorder %s152, %s153
      %p164 = scmp.eq.s32.totalorder %s18, 0
      %p165 = por %p163, %p164
      %p166 = scmp.ne.s32.totalorder %s152, %s153
      %p167 = scmp.eq.s32.totalorder %s19, 1
      %p168 = por %p166, %p167
      %p170 = scmp.ne.s32.totalorder %s153, %s169
      %p171 = scmp.eq.s32.totalorder %s19, 0
      %p172 = por %p170, %p171
      %p173 = scmp.le.s32.totalorder 1, %s13
      %p174 = scmp.lt.s32.totalorder %s13, 3
      %p175 = pnand %p173, %p174
      %p176 = pneg %p175
      // Predicated region
      $region9: #{tpu_custom_call.1} parent=5 // pred_check
        _
      $region10: #{tpu_custom_call.1} parent=5 // pred_check_branch
        %178 = sbr.rel (%p175) target = $region12
      $region11: #{tpu_custom_call.1} parent=5 // pred_region
        %s179 = ssub.s32 %s13, 1
        // Predicated region
        $region13: #{tpu_custom_call.1} parent=11 // pred_check
          %p180 = pneg %p114
        $region14: #{tpu_custom_call.1} parent=11 // pred_check_branch
          %182 = sbr.rel (%p180) target = $region16
        $region15: #{tpu_custom_call.1} parent=11 // pred_region
          %s183 = smul.u32 2, %s25
          %p184 = scmp.lt.s32.totalorder %s183, 1
          %s185 = scalar_select %p184, %s183, 1
          %s186 = scalar_lea.vmem %s2, %s185
          %s187 = smul.u32 2, %s25
        $region16: #{tpu_custom_call.1} parent=11 // pred_fallthru
          _
        // Predicated region
        $region17: #{tpu_custom_call.1} parent=11 // pred_check
          %p188 = pneg %p135
        $region18: #{tpu_custom_call.1} parent=11 // pred_check_branch
          %190 = sbr.rel (%p188) target = $region20
        $region19: #{tpu_custom_call.1} parent=11 // pred_region
          _
        $region20: #{tpu_custom_call.1} parent=11 // pred_fallthru
          _
      $region12: #{tpu_custom_call.1} parent=5 // pred_fallthru
        _
      %p191 = scmp.lt.s32.totalorder %s13, 2
      // Predicated region
      $region21: #{tpu_custom_call.1} parent=5 // pred_check
        %p192 = pneg %p191
      $region22: #{tpu_custom_call.1} parent=5 // pred_check_branch
        %194 = sbr.rel (%p192) target = $region24
      $region23: #{tpu_custom_call.1} parent=5 // pred_region
        // Predicated region
        $region25: #{tpu_custom_call.1} parent=23 // pred_check
          %p195 = pneg %p54
        $region26: #{tpu_custom_call.1} parent=23 // pred_check_branch
          %197 = sbr.rel (%p195) target = $region28
        $region27: #{tpu_custom_call.1} parent=23 // pred_region
          %p198 = scmp.lt.s32.totalorder %s20, 1
          %s199 = scalar_select %p198, %s20, 1
          %p200 = scmp.lt.s32.totalorder %s21, 0
          %s201 = scalar_select %p200, %s21, 0
          %s202 = sadd.s32 %s201, %s199
          %s203 = smul.addr %s202, 8
          %s204 = scalar_lea.vmem %s0, %s203
        $region28: #{tpu_custom_call.1} parent=23 // pred_fallthru
          _
        // Predicated region
        $region29: #{tpu_custom_call.1} parent=23 // pred_check
          %p205 = pneg %p82
        $region30: #{tpu_custom_call.1} parent=23 // pred_check_branch
          %207 = sbr.rel (%p205) target = $region32
        $region31: #{tpu_custom_call.1} parent=23 // pred_region
          %s208 = smul.u32 2, %s22
          %p209 = scmp.lt.s32.totalorder %s20, 1
          %s210 = scalar_select %p209, %s20, 1
          %p211 = scmp.lt.s32.totalorder %s208, 1
          %s212 = scalar_select %p211, %s208, 1
          %s213 = smul.addr %s210, 2
          %s214 = sadd.s32 %s212, %s213
          %s215 = scalar_lea.vmem %s1, %s214
          %s216 = smul.u32 2, %s22
        $region32: #{tpu_custom_call.1} parent=23 // pred_fallthru
          _
      $region24: #{tpu_custom_call.1} parent=5 // pred_fallthru
        _
      %p217 = scmp.le.s32.totalorder 1, %s13
      %p218 = scmp.lt.s32.totalorder %s13, 3
      %p219 = pnand %p217, %p218
      %p220 = pneg %p219
      // Predicated region
      $region33: #{tpu_custom_call.1} parent=5 // pred_check
        _
      $region34: #{tpu_custom_call.1} parent=5 // pred_check_branch
        %222 = sbr.rel (%p219) target = $region36
      $region35: #{tpu_custom_call.1} parent=5 // pred_region
        %s223 = ssub.s32 %s13, 1
        %p224 = scmp.lt.s32.totalorder %s23, 1
        %s225 = scalar_select %p224, %s23, 1
        %p226 = scmp.lt.s32.totalorder %s24, 0
        %s227 = scalar_select %p226, %s24, 0
        %s228 = sadd.s32 %s227, %s225
        %s229 = smul.addr %s228, 8
        %s230 = scalar_lea.vmem %s0, %s229
        %p231 = pneg %p60
        %p232 = pneg %p57
        %s233 = smul.u32 2, %s25
        %p234 = scmp.lt.s32.totalorder %s23, 1
        %s235 = scalar_select %p234, %s23, 1
        %p236 = scmp.lt.s32.totalorder %s233, 1
        %s237 = scalar_select %p236, %s233, 1
        %s238 = smul.addr %s235, 2
        %s239 = sadd.s32 %s237, %s238
        %s240 = scalar_lea.vmem %s1, %s239
        %p241 = pneg %p88
        %p242 = pneg %p85
        %s243 = smul.u32 2, %s25
        %p244 = scmp.lt.s32.totalorder %s243, 1
        %s245 = scalar_select %p244, %s243, 1
        %s246 = scalar_lea.vmem %s2, %s245
        %p247 = pneg %p114
        %p248 = pneg %p111
        %p249 = pneg %p135
        %p250 = pneg %p132
        %p251 = pneg %p165
        %p252 = pneg %p162
        %s253 = sand.u32 %s152, 1
        %s254 = scalar_lea.sflag [#allocation3], %s253
        %s255 = sand.u32 %s152, 1
        %s256 = smul.addr %s255, 16
        %s257 = scalar_lea.vmem [#allocation2], %s256
        %p258 = scmp.lt.s32.totalorder %s23, 1
        %s259 = scalar_select %p258, %s23, 1
        %p260 = scmp.lt.s32.totalorder %s24, 0
        %s261 = scalar_select %p260, %s24, 0
        %s262 = sadd.s32 %s261, %s259
        %s263 = smul.addr %s262, 8
        %s264 = scalar_lea.vmem %s0, %s263
        %s265 = smul.u32 2, %s25
        %p266 = scmp.lt.s32.totalorder %s23, 1
        %s267 = scalar_select %p266, %s23, 1
        %p268 = scmp.lt.s32.totalorder %s265, 1
        %s269 = scalar_select %p268, %s265, 1
        %s270 = smul.addr %s267, 2
        %s271 = sadd.s32 %s269, %s270
        %s272 = scalar_lea.vmem %s1, %s271
        %s273 = smul.u32 2, %s25
        %s274 = smul.u32 2, %s25
        %p275 = scmp.lt.s32.totalorder %s274, 1
        %s276 = scalar_select %p275, %s274, 1
        %s277 = scalar_lea.vmem %s2, %s276
        %s278 = smul.u32 2, %s25
        %s279 = smul.u32 2, %s25
        %v280 = vld [vmem:[%s264] sm:$0xff]
        %v281 = vld [vmem:[%s272] sm:$0x3]
        %v282 = vld [vmem:[%s277] sm:$0x3]
        %v283 = vlaneseq
        %v284 = vshrl.u32 %v283, 7
        %s285 = smul.u32 %s24, 8
        %v286 = vstv %s285
        %v287 = vadd.s32 %v284, %v286
        %v289 = vlaneseq
        %v290 = vshrl.u32 %v289, 7
        %v291 = vsub.s32 0, %v290
        %v292 = vrot.slane %v281, %v291
        %v293 = vlaneseq
        %v294 = vshrl.u32 %v293, 7
        %v295 = vsub.s32 1, %v294
        %v296 = vrot.slane %v281, %v295
        %300 = vset.pattern.permute.xlu0 0
        %301 = vperm.xlu0 %300, %v280
        %v302 = vpop.permute.xlu0 %301
        %v304 = vsub.f32 %v292, %v302
        %v305 = vsub.f32 %v296, %v302
        %v306 = vand.u32 2147483647, %v304
        %v307 = vand.u32 2147483647, %v305
        %v308 = vlaneseq
        %v309 = vshrl.u32 %v308, 7
        %v310 = vsub.s32 0, %v309
        %v311 = vrot.slane %v282, %v310
        %v312 = vlaneseq
        %v313 = vshrl.u32 %v312, 7
        %v314 = vsub.s32 1, %v313
        %v315 = vrot.slane %v282, %v314
        %vm316 = vcmp.gt.s32.totalorder %v311, %v287
        %vm317 = vcmp.gt.s32.totalorder %v315, %v287
        %v318 = vsub.f32 0.0, %v306
        %v319 = vsub.f32 0.0, %v307
        %v320 = vsel %vm316, %v306, %v318
        %v321 = vsel %vm317, %v307, %v319
        %v322 = vmul.f32 %v320, 2.0
        %v323 = vmul.f32 %v321, 2.0
        %v324 = vmax.f32 %v322, -1.0
        %v325 = vmax.f32 %v323, -1.0
        %v326 = vmin.f32 %v324, 1.0
        %v327 = vmin.f32 %v325, 1.0
        %v328 = vsub.f32 0.0, %v326
        %v329 = vsub.f32 0.0, %v327
        %v330 = vld [vmem:[%s3] sm:$0x3]
        %v332 = vlaneseq
        %v333 = vshrl.u32 %v332, 7
        %v334 = vsub.s32 0, %v333
        %v335 = vrot.slane %v330, %v334
        %v336 = vlaneseq
        %v337 = vshrl.u32 %v336, 7
        %v338 = vsub.s32 1, %v337
        %v339 = vrot.slane %v330, %v338
        %v342 = vmul.f32 %v328, %v335
        %v343 = vmul.f32 %v329, %v339
        %344 = vst [vmem:[%s257] sm:$0xff] %v342
        %345 = vst [vmem:[%s257 + $0x8] sm:$0xff] %v343
        %s346 = sand.u32 %s152, 1
        %s347 = scalar_lea.sflag [#allocation3], %s346
        %s348 = sand.u32 %s152, 1
        %s349 = smul.addr %s348, 16
        %s350 = scalar_lea.vmem [#allocation2], %s349
        // Predicated region
        $region37: #{tpu_custom_call.1} parent=35 // pred_check
          %p351 = pneg %p162
        $region38: #{tpu_custom_call.1} parent=35 // pred_check_branch
          %353 = sbr.rel (%p351) target = $region40
        $region39: #{tpu_custom_call.1} parent=35 // pred_region
          %s354 = smul.u32 2, %s25
          %s356 = ssub.s32 256, 256
          %357 = vsyncadd %s347, %s356
          %s358 = smul.addr %s24, 2
          %s359 = sadd.s32 %s354, %s358
          %s360 = smul.addr %s23, 2
          %s361 = sadd.s32 %s359, %s360
          %s362 = smul.addr %s361, 128
          %s363 = scalar_lea.hbm %s4, %s362
          %s365 = sshll.u32 %s350, 4
          %s366 = int_to_ptr.vmem [resolvable:$true] %s365
          %368 = dma.vmem_to_hbm [thread:$0]  %s366, 256, %s363, %s347
        $region40: #{tpu_custom_call.1} parent=35 // pred_fallthru
          _
      $region36: #{tpu_custom_call.1} parent=5 // pred_fallthru
        _
      %p369 = scmp.le.s32.totalorder 2, %s13
      // Predicated region
      $region41: #{tpu_custom_call.1} parent=5 // pred_check
        %p370 = pneg %p369
      $region42: #{tpu_custom_call.1} parent=5 // pred_check_branch
        %372 = sbr.rel (%p370) target = $region44
      $region43: #{tpu_custom_call.1} parent=5 // pred_region
        %s373 = ssub.s32 %s13, 2
        // Predicated region
        $region45: #{tpu_custom_call.1} parent=43 // pred_check
          %p374 = pneg %p168
        $region46: #{tpu_custom_call.1} parent=43 // pred_check_branch
          %376 = sbr.rel (%p374) target = $region48
        $region47: #{tpu_custom_call.1} parent=43 // pred_region
          %s377 = sand.u32 %s153, 1
          %s378 = scalar_lea.sflag [#allocation3], %s377
          %s379 = sand.u32 %s153, 1
          %s380 = smul.addr %s379, 16
          %s381 = scalar_lea.vmem [#allocation2], %s380
          %382 = dma.done %s378, 256
        $region48: #{tpu_custom_call.1} parent=43 // pred_fallthru
          _
      $region44: #{tpu_custom_call.1} parent=5 // pred_fallthru
        _
    $region6: #{tpu_custom_call.1} parent=1 // loop_footer
      %s17 = sadd.s32 1, %s13
    $region7: #{tpu_custom_call.1} parent=1 // loop_footer_branch
      %12 = sbr.rel target = $region3
    $region8: #{tpu_custom_call.1} parent=1 // loop_exit
      _
    %383 = vsyncpa [#allocation3], 1
    %s384 = scalar_lea.sflag [#allocation3], 1
    %385 = vsyncpa %s384, 1

</llo_original>
